<compile_context>
chip_gen: v5e
topology: v5e:2x2
jax: 0.10.0
libtpu: 0.0.40
codegen_flags: <defaults>
</compile_context>

<pallas_src>
import jax
import jax.numpy as jnp
from jax import lax
from jax.experimental import pallas as pl
from jax.experimental.pallas import tpu as pltpu


_DPAD = 256          # padded contraction width of the fused conv matmul
_TPAD = 128          # lane-dense padded width of the classifier output
_BN_EPS = 1e-5
_SQRT_2_OVER_PI = 0.7978845608028654

# conv hyper-params hard-coded by the module: Conv1d(H,H,3,3,1) -> Conv1d(H,H/2,2,2,1)
_K1, _S1, _P1 = 3, 3, 1
_K2, _S2, _P2 = 2, 2, 1


# ------------------------------- fused kernel --------------------------------

def _fused_call(patches, w_fused, gb, wcls, bcls, *, B, L2, O2):
    """One pallas_call: fused conv1∘conv2 matmul -> BN -> GELU -> single classifier matmul."""
    M2 = L2 * B                       # rows, ordered (position, batch)

    def kernel(p_ref, wf_ref, gb_ref, wc_ref, bc_ref, feat_ref, logits_ref, fw_ref):
        # ---- fused conv1∘conv2: ONE MXU push --------------------------------
        h2 = jnp.dot(p_ref[...], wf_ref[...],
                     preferred_element_type=jnp.float32)                     # (M2, O2)

        # ---- BatchNorm1d (training-mode batch stats over all B*L2 rows) + GELU (tanh) ----
        mean = jnp.mean(h2, axis=0, keepdims=True)
        var = jnp.mean((h2 - mean) ** 2, axis=0, keepdims=True)
        hn = (h2 - mean) * lax.rsqrt(var + _BN_EPS) * gb_ref[pl.ds(0, 1), :] \
             + gb_ref[pl.ds(1, 1), :]
        f = 0.5 * hn * (1.0 + jnp.tanh(_SQRT_2_OVER_PI * (hn + 0.044715 * hn * hn * hn)))
        feat_ref[...] = f                                   # features written exactly once

        # ---- (position, batch) rows -> (batch, position*channel) lanes ------
        # tiny ld/st shuffle through scratch: replaces 5 serial near-empty MXU pushes
        for j in range(L2):
            fw_ref[:, pl.ds(j * O2, O2)] = feat_ref[pl.ds(j * B, B), :]

        # ---- classifier: ONE matmul, lane-dense 128-wide store --------------
        logits_ref[...] = jnp.dot(fw_ref[...], wc_ref[...],
                                  preferred_element_type=jnp.float32) + bc_ref[...]

    def full(shape):
        return pl.BlockSpec(shape, lambda i, _s=shape: (0,) * len(_s))

    return pl.pallas_call(
        kernel,
        out_shape=(jax.ShapeDtypeStruct((M2, O2), jnp.float32),
                   jax.ShapeDtypeStruct((B, _TPAD), jnp.float32)),
        grid=(1,),
        in_specs=[full(patches.shape), full(w_fused.shape), full(gb.shape),
                  full(wcls.shape), full(bcls.shape)],
        out_specs=(full((M2, O2)), full((B, _TPAD))),
        scratch_shapes=[pltpu.VMEM((B, L2 * O2), jnp.float32)],
        compiler_params=pltpu.CompilerParams(dimension_semantics=("arbitrary",)),
    )(patches, w_fused, gb, wcls, bcls)


# --------------------------- host-side param prep ----------------------------

def prepare_params(params):
    """One-time algebraic conv1∘conv2 fusion + weight re-layout (hoisted out of the call path)."""
    w1, b1, w2, b2, gamma, beta, wfc, bfc = params
    O1, C, K1 = w1.shape
    O2, _, K2 = w2.shape
    T, F = wfc.shape
    L2 = F // O2
    assert K1 == _K1 and K2 == _K2

    # conv1 as (K1*C, O1) matrix; patch columns are position-major, channel-minor
    w1m = jnp.transpose(w1, (2, 1, 0)).reshape(K1 * C, O1)
    w2t = jnp.transpose(w2, (2, 1, 0))                          # (K2, O1, O2), per-tap

    # fused weight: columns [tap0 x-patch | tap1 x-patch | valid0 | valid1 | 1] -> O2
    w_fused = jnp.concatenate([
        w1m @ w2t[0],                      # tap0 x-contribution  (96, O2)
        w1m @ w2t[1],                      # tap1 x-contribution  (96, O2)
        (b1 @ w2t[0])[None, :],            # conv1 bias through tap0 (gated by valid0)
        (b1 @ w2t[1])[None, :],            # conv1 bias through tap1 (gated by valid1)
        b2[None, :],                       # conv2 bias (constant column)
    ], axis=0)                                                  # (2*K1*C + 3, O2)
    assert w_fused.shape[0] <= _DPAD
    w_fused = jnp.pad(w_fused, ((0, _DPAD - w_fused.shape[0]), (0, 0)))

    gb = jnp.stack([gamma, beta], axis=0)                       # (2, O2)

    # classifier: wfc[t, c*L2 + j] -> wcls[j*O2 + c, t], padded to 128 output lanes
    wcls = jnp.transpose(wfc.reshape(T, O2, L2), (2, 1, 0)).reshape(L2 * O2, T)
    wcls = jnp.pad(wcls, ((0, 0), (0, _TPAD - T)))
    bcls = jnp.pad(bfc, (0, _TPAD - T)).reshape(1, _TPAD)
    return (w_fused, gb, wcls, bcls)


# -------------------------------- forward ------------------------------------

def conv_encoder_forward(x, prep, targets):
    """x: (B, output_h, L) NCL. Returns (logits (B, targets), features (B, output_h/2, L2) NCL)."""
    w_fused, gb, wcls, bcls = prep
    B, C, L = x.shape
    O2 = w_fused.shape[1]
    L1 = (L + 2 * _P1 - _K1) // _S1 + 1
    L2 = (L1 + 2 * _P2 - _K2) // _S2 + 1
    assert L1 % 2 == 0 and L2 == L1 // 2 + 1
    assert wcls.shape[0] == L2 * O2
    assert 2 * _K1 * C + 3 <= _DPAD

    # fused-conv patches: output position j reads conv1-padded x positions [6j-3, 6j+3)
    x_lc = jnp.transpose(x, (0, 2, 1))                           # (B, L, C) channels-last
    n_read = min(L, L1 * _K1 - _P1)                              # x columns conv1 actually reads
    left = _K1 + _P1
    total = L2 * 2 * _K1
    x_ext = jnp.pad(x_lc[:, :n_read, :], ((0, 0), (left, total - left - n_read), (0, 0)))
    xw = x_ext.reshape(B, L2, 2 * _K1 * C)                       # (B, L2, 2*K1*C)

    # conv2 tap validity: does the tap read a real h1 position or h1 zero-padding?
    jidx = jnp.arange(L2)
    v0 = ((2 * jidx - 1 >= 0) & (2 * jidx - 1 < L1)).astype(x.dtype)
    v1 = (2 * jidx < L1).astype(x.dtype)
    extras = jnp.broadcast_to(jnp.stack([v0, v1, jnp.ones_like(v0)], axis=1)[None],
                              (B, L2, 3))

    patches = jnp.concatenate([xw, extras], axis=2)              # (B, L2, 2*K1*C + 3)
    patches = jnp.transpose(patches, (1, 0, 2)).reshape(L2 * B, 2 * _K1 * C + 3)
    patches = jnp.pad(patches, ((0, 0), (0, _DPAD - patches.shape[1])))   # (M2, 256)

    feat_jb, logits_pad = _fused_call(patches, w_fused, gb, wcls, bcls,
                                      B=B, L2=L2, O2=O2)

    features = jnp.transpose(feat_jb.reshape(L2, B, O2), (1, 2, 0))   # back to NCL (B, O2, L2)
    logits = logits_pad[:, :targets]
    return logits, features


# ---------------------------- pure-JAX reference ------------------------------

def _reference(x, params):
    w1, b1, w2, b2, gamma, beta, wfc, bfc = params
    dn = ("NCH", "OIH", "NCH")
    h1 = lax.conv_general_dilated(x, w1, (3,), [(1, 1)], dimension_numbers=dn) + b1[None, :, None]
    h2 = lax.conv_general_dilated(h1, w2, (2,), [(1, 1)], dimension_numbers=dn) + b2[None, :, None]
    mean = h2.mean(axis=(0, 2), keepdims=True)
    var = ((h2 - mean) ** 2).mean(axis=(0, 2), keepdims=True)
    hbn = (h2 - mean) / jnp.sqrt(var + _BN_EPS) * gamma[None, :, None] + beta[None, :, None]
    feat = jax.nn.gelu(hbn, approximate=False)
    flat = feat.reshape(feat.shape[0], -1)
    logits = flat @ wfc.T + bfc
    return logits, feat


# ------------------------------------ main -------------------------------------

if __name__ == "__main__":
    key = jax.random.PRNGKey(0)
    ks = jax.random.split(key, 8)

    # small, module-consistent shapes (output_h scaled 128 -> 32)
    B, H, L = 2, 32, 24          # input must have output_h channels (use_input=False)
    O1, K1 = H, 3                # Conv1d(H, H, k=3, s=3, p=1)
    O2, K2 = H // 2, 2           # Conv1d(H, H/2, k=2, s=2, p=1)
    T = 3                        # targets
    L1 = (L + 2 - K1) // K1 + 1  # 8
    L2 = (L1 + 2 - K2) // K2 + 1 # 5
    F = O2 * L2                  # num_features_for_classification = 80

    def u(k, shape, fan_in):
        bound = 1.0 / (fan_in ** 0.5)
        return jax.random.uniform(k, shape, jnp.float32, -bound, bound)

    x = jax.random.normal(ks[0], (B, H, L), jnp.float32)
    w1 = u(ks[1], (O1, H, K1), H * K1)
    b1 = u(ks[2], (O1,), H * K1)
    w2 = u(ks[3], (O2, O1, K2), O1 * K2)
    b2 = u(ks[4], (O2,), O1 * K2)
    gamma = jnp.ones((O2,), jnp.float32)    # BatchNorm1d default init
    beta = jnp.zeros((O2,), jnp.float32)
    wfc = u(ks[5], (T, F), F)
    bfc = u(ks[6], (T,), F)
    params = (w1, b1, w2, b2, gamma, beta, wfc, bfc)

    prep = prepare_params(params)                       # one-time fusion / re-layout
    fwd = jax.jit(conv_encoder_forward, static_argnums=(2,))

    logits, features = fwd(x, prep, T)
    jax.block_until_ready((logits, features))

    # sanity checks against a plain-JAX reference of the torch forward pass
    ref_logits, ref_features = _reference(x, params)
    assert logits.shape == (B, T) and features.shape == (B, O2, L2)
    assert jnp.allclose(logits, ref_logits, atol=2e-2, rtol=2e-2)
    assert jnp.allclose(features, ref_features, atol=2e-2, rtol=2e-2)

    print("KERNEL_OK")
</pallas_src>

<mosaic_0001>
module attributes {stable_mosaic.version = 11 : i64} {
  func.func @kernel(%arg0: i32, %arg1: memref<10x256xf32, #tpu.memory_space<vmem>>, %arg2: memref<256x16xf32, #tpu.memory_space<vmem>>, %arg3: memref<2x16xf32, #tpu.memory_space<vmem>>, %arg4: memref<80x128xf32, #tpu.memory_space<vmem>>, %arg5: memref<1x128xf32, #tpu.memory_space<vmem>>, %arg6: memref<10x16xf32, #tpu.memory_space<vmem>>, %arg7: memref<2x128xf32, #tpu.memory_space<vmem>>, %arg8: memref<2x80xf32, #tpu.memory_space<vmem>>) attributes {dimension_semantics = [#tpu.dimension_semantics<arbitrary>], iteration_bounds = array<i64: 1>, scalar_prefetch = 0 : i64, scratch_operands = 1 : i64, tpu.core_type = #tpu.core_type<tc>, window_params = [{pipeline_mode = #tpu.pipeline_mode<synchronous>, transform_indices = @transform_0, window_bounds = array<i64: 10, 256>}, {pipeline_mode = #tpu.pipeline_mode<synchronous>, transform_indices = @transform_1, window_bounds = array<i64: 256, 16>}, {pipeline_mode = #tpu.pipeline_mode<synchronous>, transform_indices = @transform_2, window_bounds = array<i64: 2, 16>}, {pipeline_mode = #tpu.pipeline_mode<synchronous>, transform_indices = @transform_3, window_bounds = array<i64: 80, 128>}, {pipeline_mode = #tpu.pipeline_mode<synchronous>, transform_indices = @transform_4, window_bounds = array<i64: 1, 128>}, {pipeline_mode = #tpu.pipeline_mode<synchronous>, transform_indices = @transform_5, window_bounds = array<i64: 10, 16>}, {pipeline_mode = #tpu.pipeline_mode<synchronous>, transform_indices = @transform_6, window_bounds = array<i64: 2, 128>}]} {
    %c0 = arith.constant 0 : index
    %c0_0 = arith.constant 0 : index
    %0 = vector.load %arg1[%c0, %c0_0] : memref<10x256xf32, #tpu.memory_space<vmem>>, vector<10x256xf32>
    %c0_1 = arith.constant 0 : index
    %c0_2 = arith.constant 0 : index
    %1 = vector.load %arg2[%c0_1, %c0_2] : memref<256x16xf32, #tpu.memory_space<vmem>>, vector<256x16xf32>
    %cst = arith.constant dense<0.000000e+00> : vector<10x16xf32>
    %2 = tpu.matmul %0, %1, %cst {dimension_numbers = #tpu.dot_dimension_numbers<[1], [0], [0], [1], [0, 0, 1, 1], [], []>} : vector<10x256xf32>, vector<256x16xf32>, vector<10x16xf32> -> vector<10x16xf32>
    %cst_3 = arith.constant dense<0.000000e+00> : vector<16xf32>
    %3 = vector.multi_reduction <add>, %2, %cst_3 [0] : vector<10x16xf32> to vector<16xf32>
    %4 = vector.shape_cast %3 : vector<16xf32> to vector<1x16xf32>
    %cst_4 = arith.constant 1.000000e+01 : f32
    %5 = vector.broadcast %cst_4 : f32 to vector<1x16xf32>
    %6 = arith.divf %4, %5 : vector<1x16xf32>
    %7 = vector.broadcast %6 : vector<1x16xf32> to vector<10x16xf32>
    %8 = arith.subf %2, %7 : vector<10x16xf32>
    %9 = arith.mulf %8, %8 : vector<10x16xf32>
    %cst_5 = arith.constant dense<0.000000e+00> : vector<16xf32>
    %10 = vector.multi_reduction <add>, %9, %cst_5 [0] : vector<10x16xf32> to vector<16xf32>
    %11 = vector.shape_cast %10 : vector<16xf32> to vector<1x16xf32>
    %cst_6 = arith.constant 1.000000e+01 : f32
    %12 = vector.broadcast %cst_6 : f32 to vector<1x16xf32>
    %13 = arith.divf %11, %12 : vector<1x16xf32>
    %14 = vector.broadcast %6 : vector<1x16xf32> to vector<10x16xf32>
    %15 = arith.subf %2, %14 : vector<10x16xf32>
    %cst_7 = arith.constant 9.99999974E-6 : f32
    %16 = vector.broadcast %cst_7 : f32 to vector<1x16xf32>
    %17 = arith.addf %13, %16 : vector<1x16xf32>
    %18 = math.rsqrt %17 : vector<1x16xf32>
    %19 = vector.broadcast %18 : vector<1x16xf32> to vector<10x16xf32>
    %20 = arith.mulf %15, %19 : vector<10x16xf32>
    %c0_8 = arith.constant 0 : index
    %c0_9 = arith.constant 0 : index
    %21 = vector.load %arg3[%c0_8, %c0_9] : memref<2x16xf32, #tpu.memory_space<vmem>>, vector<1x16xf32>
    %22 = vector.broadcast %21 : vector<1x16xf32> to vector<10x16xf32>
    %23 = arith.mulf %20, %22 : vector<10x16xf32>
    %c1 = arith.constant 1 : index
    %c0_10 = arith.constant 0 : index
    %24 = vector.load %arg3[%c1, %c0_10] : memref<2x16xf32, #tpu.memory_space<vmem>>, vector<1x16xf32>
    %25 = vector.broadcast %24 : vector<1x16xf32> to vector<10x16xf32>
    %26 = arith.addf %23, %25 : vector<10x16xf32>
    %cst_11 = arith.constant 5.000000e-01 : f32
    %27 = vector.broadcast %cst_11 : f32 to vector<10x16xf32>
    %28 = arith.mulf %27, %26 : vector<10x16xf32>
    %cst_12 = arith.constant 4.471500e-02 : f32
    %29 = vector.broadcast %cst_12 : f32 to vector<10x16xf32>
    %30 = arith.mulf %29, %26 : vector<10x16xf32>
    %31 = arith.mulf %30, %26 : vector<10x16xf32>
    %32 = arith.mulf %31, %26 : vector<10x16xf32>
    %33 = arith.addf %26, %32 : vector<10x16xf32>
    %cst_13 = arith.constant 0.797884583 : f32
    %34 = vector.broadcast %cst_13 : f32 to vector<10x16xf32>
    %35 = arith.mulf %34, %33 : vector<10x16xf32>
    %36 = math.tanh %35 : vector<10x16xf32>
    %cst_14 = arith.constant 1.000000e+00 : f32
    %37 = vector.broadcast %cst_14 : f32 to vector<10x16xf32>
    %38 = arith.addf %37, %36 : vector<10x16xf32>
    %39 = arith.mulf %28, %38 : vector<10x16xf32>
    %c0_15 = arith.constant 0 : index
    %c0_16 = arith.constant 0 : index
    %40 = vector.load %arg6[%c0_15, %c0_16] : memref<10x16xf32, #tpu.memory_space<vmem>>, vector<10x16xf32>
    tpu.vector_store %arg6[%c0_15, %c0_16], %39 {strides = array<i32>} : memref<10x16xf32, #tpu.memory_space<vmem>>, vector<10x16xf32>,
    %c0_17 = arith.constant 0 : index
    %c0_18 = arith.constant 0 : index
    %41 = vector.load %arg6[%c0_17, %c0_18] : memref<10x16xf32, #tpu.memory_space<vmem>>, vector<2x16xf32>
    %c0_19 = arith.constant 0 : index
    %c0_20 = arith.constant 0 : index
    %42 = vector.load %arg8[%c0_19, %c0_20] : memref<2x80xf32, #tpu.memory_space<vmem>>, vector<2x16xf32>
    tpu.vector_store %arg8[%c0_19, %c0_20], %41 {strides = array<i32>} : memref<2x80xf32, #tpu.memory_space<vmem>>, vector<2x16xf32>,
    %c2 = arith.constant 2 : index
    %c0_21 = arith.constant 0 : index
    %43 = vector.load %arg6[%c2, %c0_21] : memref<10x16xf32, #tpu.memory_space<vmem>>, vector<2x16xf32>
    %c0_22 = arith.constant 0 : index
    %c16 = arith.constant 16 : index
    %44 = vector.load %arg8[%c0_22, %c16] : memref<2x80xf32, #tpu.memory_space<vmem>>, vector<2x16xf32>
    tpu.vector_store %arg8[%c0_22, %c16], %43 {strides = array<i32>} : memref<2x80xf32, #tpu.memory_space<vmem>>, vector<2x16xf32>,
    %c4 = arith.constant 4 : index
    %c0_23 = arith.constant 0 : index
    %45 = vector.load %arg6[%c4, %c0_23] : memref<10x16xf32, #tpu.memory_space<vmem>>, vector<2x16xf32>
    %c0_24 = arith.constant 0 : index
    %c32 = arith.constant 32 : index
    %46 = vector.load %arg8[%c0_24, %c32] : memref<2x80xf32, #tpu.memory_space<vmem>>, vector<2x16xf32>
    tpu.vector_store %arg8[%c0_24, %c32], %45 {strides = array<i32>} : memref<2x80xf32, #tpu.memory_space<vmem>>, vector<2x16xf32>,
    %c6 = arith.constant 6 : index
    %c0_25 = arith.constant 0 : index
    %47 = vector.load %arg6[%c6, %c0_25] : memref<10x16xf32, #tpu.memory_space<vmem>>, vector<2x16xf32>
    %c0_26 = arith.constant 0 : index
    %c48 = arith.constant 48 : index
    %48 = vector.load %arg8[%c0_26, %c48] : memref<2x80xf32, #tpu.memory_space<vmem>>, vector<2x16xf32>
    tpu.vector_store %arg8[%c0_26, %c48], %47 {strides = array<i32>} : memref<2x80xf32, #tpu.memory_space<vmem>>, vector<2x16xf32>,
    %c8 = arith.constant 8 : index
    %c0_27 = arith.constant 0 : index
    %49 = vector.load %arg6[%c8, %c0_27] : memref<10x16xf32, #tpu.memory_space<vmem>>, vector<2x16xf32>
    %c0_28 = arith.constant 0 : index
    %c64 = arith.constant 64 : index
    %50 = vector.load %arg8[%c0_28, %c64] : memref<2x80xf32, #tpu.memory_space<vmem>>, vector<2x16xf32>
    tpu.vector_store %arg8[%c0_28, %c64], %49 {strides = array<i32>} : memref<2x80xf32, #tpu.memory_space<vmem>>, vector<2x16xf32>,
    %c0_29 = arith.constant 0 : index
    %c0_30 = arith.constant 0 : index
    %51 = vector.load %arg8[%c0_29, %c0_30] : memref<2x80xf32, #tpu.memory_space<vmem>>, vector<2x80xf32>
    %c0_31 = arith.constant 0 : index
    %c0_32 = arith.constant 0 : index
    %52 = vector.load %arg4[%c0_31, %c0_32] : memref<80x128xf32, #tpu.memory_space<vmem>>, vector<80x128xf32>
    %cst_33 = arith.constant dense<0.000000e+00> : vector<2x128xf32>
    %53 = tpu.matmul %51, %52, %cst_33 {dimension_numbers = #tpu.dot_dimension_numbers<[1], [0], [0], [1], [0, 0, 1, 1], [], []>} : vector<2x80xf32>, vector<80x128xf32>, vector<2x128xf32> -> vector<2x128xf32>
    %c0_34 = arith.constant 0 : index
    %c0_35 = arith.constant 0 : index
    %54 = vector.load %arg5[%c0_34, %c0_35] : memref<1x128xf32, #tpu.memory_space<vmem>>, vector<1x128xf32>
    %55 = vector.broadcast %54 : vector<1x128xf32> to vector<2x128xf32>
    %56 = arith.addf %53, %55 : vector<2x128xf32>
    %c0_36 = arith.constant 0 : index
    %c0_37 = arith.constant 0 : index
    %57 = vector.load %arg7[%c0_36, %c0_37] : memref<2x128xf32, #tpu.memory_space<vmem>>, vector<2x128xf32>
    tpu.vector_store %arg7[%c0_36, %c0_37], %56 {strides = array<i32>} : memref<2x128xf32, #tpu.memory_space<vmem>>, vector<2x128xf32>,
    return
  }
  func.func @transform_0(%arg0: i32) -> (i32, i32) {
    %c0_i32 = arith.constant 0 : i32
    %c0_i32_0 = arith.constant 0 : i32
    %c0_i32_1 = arith.constant 0 : i32
    return %c0_i32, %c0_i32_0 : i32, i32
  }
  func.func @transform_1(%arg0: i32) -> (i32, i32) {
    %c0_i32 = arith.constant 0 : i32
    %c0_i32_0 = arith.constant 0 : i32
    %c0_i32_1 = arith.constant 0 : i32
    return %c0_i32, %c0_i32_0 : i32, i32
  }
  func.func @transform_2(%arg0: i32) -> (i32, i32) {
    %c0_i32 = arith.constant 0 : i32
    %c0_i32_0 = arith.constant 0 : i32
    %c0_i32_1 = arith.constant 0 : i32
    return %c0_i32, %c0_i32_0 : i32, i32
  }
  func.func @transform_3(%arg0: i32) -> (i32, i32) {
    %c0_i32 = arith.constant 0 : i32
    %c0_i32_0 = arith.constant 0 : i32
    %c0_i32_1 = arith.constant 0 : i32
    return %c0_i32, %c0_i32_0 : i32, i32
  }
  func.func @transform_4(%arg0: i32) -> (i32, i32) {
    %c0_i32 = arith.constant 0 : i32
    %c0_i32_0 = arith.constant 0 : i32
    %c0_i32_1 = arith.constant 0 : i32
    return %c0_i32, %c0_i32_0 : i32, i32
  }
  func.func @transform_5(%arg0: i32) -> (i32, i32) {
    %c0_i32 = arith.constant 0 : i32
    %c0_i32_0 = arith.constant 0 : i32
    %c0_i32_1 = arith.constant 0 : i32
    return %c0_i32, %c0_i32_0 : i32, i32
  }
  func.func @transform_6(%arg0: i32) -> (i32, i32) {
    %c0_i32 = arith.constant 0 : i32
    %c0_i32_0 = arith.constant 0 : i32
    %c0_i32_1 = arith.constant 0 : i32
    return %c0_i32, %c0_i32_0 : i32, i32
  }
}

</mosaic_0001>

<llo_original>
// kernel: conv_encoder_forward.1
$region0: #{conv_encoder_forward.1}
  #allocation0 [shape = 'u32[]', space=smem, size = 0x4, offset = 0x4, fixed_abs, tag = 'smem constant byte address 0x4 - core index']
  #allocation1 [shape = 'u32[72,128]{1,0:T(1,128)}', space=vmem, size = 0x9000, scoped, tag = 'internal scratch']
  #allocation2 [shape = 'f32[2,80]{1,0:T(2,128)}', space=vmem, size = 0x400, scoped, tag = 'scratch operand']
  %s0 = inlined_call_operand.vmem [shape: f32[10,256], index: 0, kind: input, shape index: {}]
  %s1 = inlined_call_operand.vmem [shape: f32[256,16], index: 1, kind: input, shape index: {}]
  %s2 = inlined_call_operand.vmem [shape: f32[2,16], index: 2, kind: input, shape index: {}]
  %s3 = inlined_call_operand.vmem [shape: f32[80,128], index: 3, kind: input, shape index: {}]
  %s4 = inlined_call_operand.vmem [shape: f32[1,128], index: 4, kind: input, shape index: {}]
  %s5 = inlined_call_operand.vmem [shape: f32[10,16], index: 5, kind: output, shape index: {0}]
  %s6 = inlined_call_operand.hbm [shape: f32[2,128], index: 6, kind: output, shape index: {1}]
  %7 = xla_tuple %s5, %s6
  %s8 = sld [smem:[#allocation0]]
  $region38: #{conv_encoder_forward.1} parent=0
    _
  %s10 = ssub.s32 1, %s8
  %s11 = scalar_select 0, %s10, %s8
  $region1: #{conv_encoder_forward.1} parent=0
    #allocation3 [shape = 'u8[1024]{0}', space=vmem, size = 0x400, scoped, tag = 'output window, operand 1, single buffered']
    #allocation4 [shape = 's32[1]{0}', space=sflag, size = 0x4, scoped, tag = 'scoped memory for conv_encoder_forward.1']
    %12 = vsyncpa [#allocation4], 0
    // Predicated region
    $region2: #{conv_encoder_forward.1} parent=1 // pred_check
      _
    $region3: #{conv_encoder_forward.1} parent=1 // pred_check_branch
      %14 = sbr.rel (0) target = $region5
    $region4: #{conv_encoder_forward.1} parent=1 // pred_region
      _
    $region5: #{conv_encoder_forward.1} parent=1 // pred_fallthru
      _
    // Predicated region
    $region6: #{conv_encoder_forward.1} parent=1 // pred_check
      _
    $region7: #{conv_encoder_forward.1} parent=1 // pred_check_branch
      %16 = sbr.rel (0) target = $region9
    $region8: #{conv_encoder_forward.1} parent=1 // pred_region
      _
    $region9: #{conv_encoder_forward.1} parent=1 // pred_fallthru
      _
    // Predicated region
    $region10: #{conv_encoder_forward.1} parent=1 // pred_check
      _
    $region11: #{conv_encoder_forward.1} parent=1 // pred_check_branch
      %18 = sbr.rel (0) target = $region13
    $region12: #{conv_encoder_forward.1} parent=1 // pred_region
      _
    $region13: #{conv_encoder_forward.1} parent=1 // pred_fallthru
      _
    // Predicated region
    $region14: #{conv_encoder_forward.1} parent=1 // pred_check
      _
    $region15: #{conv_encoder_forward.1} parent=1 // pred_check_branch
      %20 = sbr.rel (0) target = $region17
    $region16: #{conv_encoder_forward.1} parent=1 // pred_region
      _
    $region17: #{conv_encoder_forward.1} parent=1 // pred_fallthru
      _
    // Predicated region
    $region18: #{conv_encoder_forward.1} parent=1 // pred_check
      _
    $region19: #{conv_encoder_forward.1} parent=1 // pred_check_branch
      %22 = sbr.rel (0) target = $region21
    $region20: #{conv_encoder_forward.1} parent=1 // pred_region
      _
    $region21: #{conv_encoder_forward.1} parent=1 // pred_fallthru
      _
    %v23 = vld [vmem:[%s0] sm:$0xff]
    %v24 = vld [vmem:[%s0 + $0x8] sm:$0xff]
    %v25 = vld [vmem:[%s0 + $0x10] sm:$0x3]
    %v26 = vld [vmem:[%s0 + $0x18] sm:$0x3]
    %v27 = vld [vmem:[%s1] sm:$0xff]
    %v28 = vld [vmem:[%s1 + $0x8] sm:$0xff]
    %v29 = vld [vmem:[%s1 + $0x10] sm:$0xff]
    %v30 = vld [vmem:[%s1 + $0x18] sm:$0xff]
    %v31 = vld [vmem:[%s1 + $0x20] sm:$0xff]
    %v32 = vld [vmem:[%s1 + $0x28] sm:$0xff]
    %v33 = vld [vmem:[%s1 + $0x30] sm:$0xff]
    %v34 = vld [vmem:[%s1 + $0x38] sm:$0xff]
    %v35 = vld [vmem:[%s1 + $0x40] sm:$0xff]
    %v36 = vld [vmem:[%s1 + $0x48] sm:$0xff]
    %v37 = vld [vmem:[%s1 + $0x50] sm:$0xff]
    %v38 = vld [vmem:[%s1 + $0x58] sm:$0xff]
    %v39 = vld [vmem:[%s1 + $0x60] sm:$0xff]
    %v40 = vld [vmem:[%s1 + $0x68] sm:$0xff]
    %v41 = vld [vmem:[%s1 + $0x70] sm:$0xff]
    %v42 = vld [vmem:[%s1 + $0x78] sm:$0xff]
    %v43 = vld [vmem:[%s1 + $0x80] sm:$0xff]
    %v44 = vld [vmem:[%s1 + $0x88] sm:$0xff]
    %v45 = vld [vmem:[%s1 + $0x90] sm:$0xff]
    %v46 = vld [vmem:[%s1 + $0x98] sm:$0xff]
    %v47 = vld [vmem:[%s1 + $0xa0] sm:$0xff]
    %v48 = vld [vmem:[%s1 + $0xa8] sm:$0xff]
    %v49 = vld [vmem:[%s1 + $0xb0] sm:$0xff]
    %v50 = vld [vmem:[%s1 + $0xb8] sm:$0xff]
    %v51 = vld [vmem:[%s1 + $0xc0] sm:$0xff]
    %v52 = vld [vmem:[%s1 + $0xc8] sm:$0xff]
    %v53 = vld [vmem:[%s1 + $0xd0] sm:$0xff]
    %v54 = vld [vmem:[%s1 + $0xd8] sm:$0xff]
    %v55 = vld [vmem:[%s1 + $0xe0] sm:$0xff]
    %v56 = vld [vmem:[%s1 + $0xe8] sm:$0xff]
    %v57 = vld [vmem:[%s1 + $0xf0] sm:$0xff]
    %v58 = vld [vmem:[%s1 + $0xf8] sm:$0xff]
    %59 = vmatpush.msra.mxu0 %v42
    %60 = vmatpush.msra.mxu0 %v41
    %61 = vmatpush.msra.mxu0 %v40
    %62 = vmatpush.msra.mxu0 %v39
    %63 = vmatpush.msra.mxu0 %v38
    %64 = vmatpush.msra.mxu0 %v37
    %65 = vmatpush.msra.mxu0 %v36
    %66 = vmatpush.msra.mxu0 %v35
    %67 = vmatpush.msra.mxu0 %v34
    %68 = vmatpush.msra.mxu0 %v33
    %69 = vmatpush.msra.mxu0 %v32
    %70 = vmatpush.msra.mxu0 %v31
    %71 = vmatpush.msra.mxu0 %v30
    %72 = vmatpush.msra.mxu0 %v29
    %73 = vmatpush.msra.mxu0 %v28
    %74 = vmatpush.msra.mxu0 %v27
    %75 = vmatmul.f32.gmra.mxu0 %v23
    %v76 = vpop.f32.mrf.mxu0
    %v77 = vadd.f32 0.0, %v76
    %78 = vmatmul.f32.gmra.mxu0 %v25
    %v79 = vpop.f32.mrf.mxu0
    %v80 = vadd.f32 0.0, %v79
    %81 = vdwg.mxu0
    %82 = vmatpush.msra.mxu0 %v58
    %83 = vmatpush.msra.mxu0 %v57
    %84 = vmatpush.msra.mxu0 %v56
    %85 = vmatpush.msra.mxu0 %v55
    %86 = vmatpush.msra.mxu0 %v54
    %87 = vmatpush.msra.mxu0 %v53
    %88 = vmatpush.msra.mxu0 %v52
    %89 = vmatpush.msra.mxu0 %v51
    %90 = vmatpush.msra.mxu0 %v50
    %91 = vmatpush.msra.mxu0 %v49
    %92 = vmatpush.msra.mxu0 %v48
    %93 = vmatpush.msra.mxu0 %v47
    %94 = vmatpush.msra.mxu0 %v46
    %95 = vmatpush.msra.mxu0 %v45
    %96 = vmatpush.msra.mxu0 %v44
    %97 = vmatpush.msra.mxu0 %v43
    %98 = vmatmul.f32.gmra.mxu0 %v24
    %v99 = vpop.f32.mrf.mxu0
    %v100 = vadd.f32 %v77, %v99
    %101 = vmatmul.f32.gmra.mxu0 %v26
    %v102 = vpop.f32.mrf.mxu0
    %v103 = vadd.f32 %v80, %v102
    %104 = vdwg.mxu0
    %vm105 = vcmask 130048
    %v106 = vsel %vm105, %v100, 0.0
    %vm107 = vcmask 123904
    %v108 = vsel %vm107, %v103, 0.0
    %v109 = vadd.f32 %v106, %v108
    %v110 = vrot.slane %v109, 4
    %v111 = vadd.f32 %v109, %v110
    %v112 = vrot.slane %v111, 2
    %v113 = vadd.f32 %v111, %v112
    %v114 = vrot.slane %v113, 1
    %v115 = vadd.f32 %v113, %v114
    %v116 = vrcp.pop 10.0
    %v117 = vmul.f32 10.0, %v116
    %v118 = vsub.f32 1.0, %v117
    %v119 = vmul.f32 %v116, %v118
    %v120 = vadd.f32 %v116, %v119
    %vm121 = vweird.f32 %v116
    %v122 = vsel %vm121, %v116, %v120
    %v123 = vmul.f32 %v115, %v122
    %v124 = vsub.f32 %v100, %v123
    %v125 = vsub.f32 %v103, %v123
    %v126 = vmul.f32 %v124, %v124
    %v127 = vmul.f32 %v125, %v125
    %v128 = vsel %vm105, %v126, 0.0
    %v129 = vsel %vm107, %v127, 0.0
    %v130 = vadd.f32 %v128, %v129
    %v131 = vrot.slane %v130, 4
    %v132 = vadd.f32 %v130, %v131
    %v133 = vrot.slane %v132, 2
    %v134 = vadd.f32 %v132, %v133
    %v135 = vrot.slane %v134, 1
    %v136 = vadd.f32 %v134, %v135
    %v137 = vmul.f32 %v136, %v122
    %v138 = vadd.f32 %v137, 1e-05
    %v139 = vrsqrt.pop %v138
    %v140 = vmul.f32 %v139, %v138
    %v141 = vmul.f32 %v140, %v139
    %v142 = vmul.f32 0.5, %v141
    %v143 = vsub.f32 1.5, %v142
    %v144 = vmul.f32 %v139, %v143
    %vm145 = vweird.f32 %v138
    %vm146 = vweird.f32 %v139
    %vm147 = vmor %vm145, %vm146
    %v148 = vsel %vm147, %v139, %v144
    %v149 = vmul.f32 %v124, %v148
    %v150 = vmul.f32 %v125, %v148
    %v151 = vld [vmem:[%s2] sm:$0x1]
    %v152 = vperm.slane %v151, 0
    %v153 = vmul.f32 %v149, %v152
    %v154 = vmul.f32 %v150, %v152
    %v155 = vld [vmem:[%s2 + $0x1] sm:$0x1]
    %v156 = vperm.slane %v155, 0
    %v157 = vadd.f32 %v153, %v156
    %v158 = vadd.f32 %v154, %v156
    %v159 = vmul.f32 %v157, 0.5
    %v160 = vmul.f32 %v158, 0.5
    %v161 = vmul.f32 %v157, 0.044715
    %v162 = vmul.f32 %v158, 0.044715
    %v163 = vmul.f32 %v161, %v157
    %v164 = vmul.f32 %v162, %v158
    %v165 = vmul.f32 %v163, %v157
    %v166 = vmul.f32 %v164, %v158
    %v167 = vadd.f32 %v157, %v165
    %v168 = vadd.f32 %v158, %v166
    %v169 = vmul.f32 %v167, 0.7978846
    %v170 = vmul.f32 %v168, 0.7978846
    %v171 = vtanh.pop %v169
    %v172 = vtanh.pop %v170
    %v173 = vadd.f32 %v171, 1.0
    %v174 = vadd.f32 %v172, 1.0
    %v175 = vmul.f32 %v159, %v173
    %v176 = vmul.f32 %v160, %v174
    %177 = vst.msk [vmem:[%s5] sm:$0xff] %vm105, %v175
    %178 = vst.msk [vmem:[%s5 + $0x8] sm:$0x3] %vm107, %v176
    %v179 = vld [vmem:[%s5] sm:$0x3]
    %180 = vst.msk [vmem:[#allocation2] sm:$0x3] %vm107, %v179
    %v181 = vld [vmem:[%s5 + $0x2] sm:$0x3]
    %183 = vrot.lane.b32.xlu0 %v181, 16
    %v184 = vpop.permute.xlu0 %183
    %vm186 = vcmask 255104
    %187 = vst.msk [vmem:[#allocation2] sm:$0x3] %vm186, %v184
    %v188 = vld [vmem:[%s5 + $0x4] sm:$0x3]
    %190 = vrot.lane.b32.xlu0 %v188, 32
    %v191 = vpop.permute.xlu0 %190
    %vm193 = vcmask 386304
    %194 = vst.msk [vmem:[#allocation2] sm:$0x3] %vm193, %v191
    %v195 = vld [vmem:[%s5 + $0x6] sm:$0x3]
    %197 = vrot.lane.b32.xlu0 %v195, 48
    %v198 = vpop.permute.xlu0 %197
    %vm200 = vcmask 517504
    %201 = vst.msk [vmem:[#allocation2] sm:$0x3] %vm200, %v198
    %v202 = vld [vmem:[%s5 + $0x8] sm:$0x3]
    %204 = vrot.lane.b32.xlu0 %v202, 64
    %v205 = vpop.permute.xlu0 %204
    %vm207 = vcmask 648704
    %208 = vst.msk [vmem:[#allocation2] sm:$0x3] %vm207, %v205
    %v209 = vld [vmem:[#allocation2] sm:$0x3]
    %v210 = vld [vmem:[%s3] sm:$0xff]
    %v211 = vld [vmem:[%s3 + $0x8] sm:$0xff]
    %v212 = vld [vmem:[%s3 + $0x10] sm:$0xff]
    %v213 = vld [vmem:[%s3 + $0x18] sm:$0xff]
    %v214 = vld [vmem:[%s3 + $0x20] sm:$0xff]
    %v215 = vld [vmem:[%s3 + $0x28] sm:$0xff]
    %v216 = vld [vmem:[%s3 + $0x30] sm:$0xff]
    %v217 = vld [vmem:[%s3 + $0x38] sm:$0xff]
    %v218 = vld [vmem:[%s3 + $0x40] sm:$0xff]
    %v219 = vld [vmem:[%s3 + $0x48] sm:$0xff]
    %v220 = vld [vmem:[%s4] sm:$0x1]
    %v222 = vperm.slane %v220, 0
    %vm224 = vcmask 654336
    %v226 = vsel %vm224, %v209, 0
    %228 = vmatpush.msra.mxu0 0.0
    %229 = vmatpush.msra.mxu0 0.0
    %230 = vmatpush.msra.mxu0 0.0
    %231 = vmatpush.msra.mxu0 0.0
    %232 = vmatpush.msra.mxu0 0.0
    %233 = vmatpush.msra.mxu0 0.0
    %234 = vmatpush.msra.mxu0 %v219
    %235 = vmatpush.msra.mxu0 %v218
    %236 = vmatpush.msra.mxu0 %v217
    %237 = vmatpush.msra.mxu0 %v216
    %238 = vmatpush.msra.mxu0 %v215
    %239 = vmatpush.msra.mxu0 %v214
    %240 = vmatpush.msra.mxu0 %v213
    %241 = vmatpush.msra.mxu0 %v212
    %242 = vmatpush.msra.mxu0 %v211
    %243 = vmatpush.msra.mxu0 %v210
    %244 = vmatmul.f32.gmra.mxu0 %v226
    %v245 = vpop.f32.mrf.mxu0
    %v246 = vadd.f32 %v222, %v245
    %247 = vdwg.mxu0
    %248 = vst [vmem:[#allocation3] sm:$0x3] %v246
    // Predicated region
    $region22: #{conv_encoder_forward.1} parent=1 // pred_check
      _
    $region23: #{conv_encoder_forward.1} parent=1 // pred_check_branch
      %250 = sbr.rel (0) target = $region25
    $region24: #{conv_encoder_forward.1} parent=1 // pred_region
      _
    $region25: #{conv_encoder_forward.1} parent=1 // pred_fallthru
      _
    // Predicated region
    $region26: #{conv_encoder_forward.1} parent=1 // pred_check
      _
    $region27: #{conv_encoder_forward.1} parent=1 // pred_check_branch
      %252 = sbr.rel (0) target = $region29
    $region28: #{conv_encoder_forward.1} parent=1 // pred_region
      %254 = vsyncadd [#allocation4], 0
      %s256 = sshll.u32 [#allocation3], 4
      %s257 = int_to_ptr.vmem [resolvable:$true] %s256
      %s258 = sshll.u32 %s6, 4
      %s259 = int_to_ptr.hbm [resolvable:$true] %s258
      %261 = dma.vmem_to_hbm [thread:$0]  %s257, 32, %s259, [#allocation4]
    $region29: #{conv_encoder_forward.1} parent=1 // pred_fallthru
      _
    // Predicated region
    $region30: #{conv_encoder_forward.1} parent=1 // pred_check
      _
    $region31: #{conv_encoder_forward.1} parent=1 // pred_check_branch
      %263 = sbr.rel (0) target = $region33
    $region32: #{conv_encoder_forward.1} parent=1 // pred_region
      _
    $region33: #{conv_encoder_forward.1} parent=1 // pred_fallthru
      _
    // Predicated region
    $region34: #{conv_encoder_forward.1} parent=1 // pred_check
      _
    $region35: #{conv_encoder_forward.1} parent=1 // pred_check_branch
      %265 = sbr.rel (0) target = $region37
    $region36: #{conv_encoder_forward.1} parent=1 // pred_region
      %267 = dma.done [#allocation4], 32
    $region37: #{conv_encoder_forward.1} parent=1 // pred_fallthru
      _
    %268 = vsyncpa [#allocation4], 1

</llo_original>
